<compile_context>
chip_gen: v7x
topology: tpu7x:2x2x1
jax: 0.10.0
libtpu: 0.0.40
codegen_flags: <defaults>
</compile_context>

<pallas_src>
import functools

import jax
import jax.numpy as jnp
from jax.experimental import pallas as pl
from jax.experimental.pallas import tpu as pltpu

_MIB = 1024 * 1024


def _round_up(x, m):
    return (x + m - 1) // m * m


def _pick_tile(n, candidates):
    """Largest candidate tile that exactly divides n (n is a multiple of 128)."""
    for c in candidates:
        if n >= c and n % c == 0:
            return c
    return n


def _cast_pad(a, dtype, pads):
    """Cast (if needed) then pad (if needed): avoids a full-size extra HBM copy
    when the array is already the right dtype / already 128-aligned, and pads
    the narrow (bf16) array instead of the wide (f32) one."""
    if a.dtype != dtype:
        a = a.astype(dtype)
    if any(lo or hi for lo, hi in pads):
        a = jnp.pad(a, pads)
    return a


# ---------------------- stage 1: support = x @ W ----------------------

def _support_kernel(x_ref, w_ref, o_ref):
    o_ref[...] = jnp.dot(
        x_ref[...], w_ref[...], preferred_element_type=jnp.float32
    ).astype(o_ref.dtype)


def _compute_support(x, w, *, out_dtype):
    N, F_in = x.shape
    F_out = w.shape[1]
    isz = jnp.dtype(x.dtype).itemsize
    osz = jnp.dtype(out_dtype).itemsize

    tile_n = _pick_tile(N, (512, 256, 128))

    # VMEM audit: double-buffered x tile + (resident but conservatively 2x) W
    # + double-buffered output tile.  Shrink the row tile if a wide layer
    # would not fit; W itself staying resident is unavoidable at this level.
    def _est(tn):
        return 2 * tn * F_in * isz + 2 * F_in * F_out * isz + 2 * tn * F_out * osz

    while tile_n > 128 and _est(tile_n) > 24 * _MIB:
        tile_n //= 2
    vmem_limit = int(min(max(_est(tile_n) + 8 * _MIB, 24 * _MIB), 100 * _MIB))

    return pl.pallas_call(
        _support_kernel,
        out_shape=jax.ShapeDtypeStruct((N, F_out), out_dtype),
        grid_spec=pltpu.PrefetchScalarGridSpec(
            num_scalar_prefetch=0,
            grid=(N // tile_n,),
            in_specs=[
                pl.BlockSpec((tile_n, F_in), lambda i: (i, 0)),
                pl.BlockSpec((F_in, F_out), lambda i: (0, 0)),
            ],
            out_specs=pl.BlockSpec((tile_n, F_out), lambda i: (i, 0)),
        ),
        compiler_params=pltpu.CompilerParams(
            dimension_semantics=("parallel",),
            vmem_limit_bytes=vmem_limit,
        ),
    )(x, w)


# ------------------ stage 2: out = adj @ support + bias ------------------

def _gcn_kernel_streamed(adj_ref, s_ref, b_ref, o_ref, acc_ref):
    """support streamed in (tk, tf) tiles (fallback when it can't be resident)."""
    k = pl.program_id(2)

    @pl.when(k == 0)
    def _():
        # fold bias into the accumulator init -> epilogue is a pure cast+store
        acc_ref[...] = jnp.broadcast_to(b_ref[...], acc_ref.shape)

    acc_ref[...] += jnp.dot(
        adj_ref[...], s_ref[...], preferred_element_type=jnp.float32
    )

    @pl.when(k == pl.num_programs(2) - 1)
    def _():
        o_ref[...] = acc_ref[...].astype(o_ref.dtype)


def _gcn_kernel_resident(adj_ref, s_ref, b_ref, o_ref, acc_ref, *, tk):
    """support fully VMEM-resident (constant block index -> DMA'd once);
    the reduction tile is sliced inside the kernel."""
    k = pl.program_id(2)

    @pl.when(k == 0)
    def _():
        acc_ref[...] = jnp.broadcast_to(b_ref[...], acc_ref.shape)

    ks = pl.multiple_of(k * tk, tk)
    acc_ref[...] += jnp.dot(
        adj_ref[...], s_ref[pl.ds(ks, tk), :], preferred_element_type=jnp.float32
    )

    @pl.when(k == pl.num_programs(2) - 1)
    def _():
        o_ref[...] = acc_ref[...].astype(o_ref.dtype)


def graph_convolution(adj, x, weight, bias, *, use_bf16=True):
    """GCN forward: out = adj @ (x @ weight) + bias.

    adj: [N, N], x: [N, F_in], weight: [F_in, F_out], bias: [F_out].
    use_bf16 (default True): adj / support feed the MXU in bf16 while keeping
    f32 accumulation and f32 bias add.  Set False for exact-f32 semantics.
    """
    N, F_in = x.shape
    F_out = weight.shape[1]
    assert adj.shape == (N, N)
    assert bias.shape == (F_out,)

    out_dtype = x.dtype
    in_dtype = jnp.bfloat16 if use_bf16 else x.dtype
    isz = jnp.dtype(in_dtype).itemsize
    osz = jnp.dtype(out_dtype).itemsize

    # Lane/sublane-friendly padded sizes (unmasked, lane-dense stores).
    n_pad = _round_up(N, 128)
    f_out_pad = _round_up(F_out, 128)

    adj_p = _cast_pad(adj, in_dtype, ((0, n_pad - N), (0, n_pad - N)))
    x_p = _cast_pad(x, in_dtype, ((0, n_pad - N), (0, 0)))
    w_p = _cast_pad(weight, in_dtype, ((0, 0), (0, f_out_pad - F_out)))
    b_p = _cast_pad(bias, jnp.float32, ((0, f_out_pad - F_out),)).reshape(1, f_out_pad)

    # -------- stage 1: support computed once --------
    support = _compute_support(x_p, w_p, out_dtype=in_dtype)

    # -------- stage 2 tiling --------
    # Row tile as large as possible (amortizes grid-step overhead and any
    # support re-reads), but keep >= 2 row tiles so the parallel axis can be
    # sharded across both v7x TensorCores whenever the problem allows it.
    tn = _pick_tile(n_pad, (1024, 512, 256, 128))
    while tn > 128 and n_pad // tn < 2:
        tn //= 2
    tk = _pick_tile(n_pad, (512, 256, 128))  # reduction tile over adj columns
    # F_out tile axis only when the output is very wide (keeps v7x VMEM happy).
    tf = f_out_pad if f_out_pad <= 1024 else _pick_tile(f_out_pad, (1024, 512, 256, 128))

    grid = (n_pad // tn, f_out_pad // tf, n_pad // tk)

    # Keep support fully resident (single DMA) when it fits alongside the
    # double-buffered adj/out tiles and the f32 accumulator.
    support_bytes = n_pad * f_out_pad * isz
    base_bytes = (2 * tn * tk * isz          # adj tiles (double-buffered)
                  + 2 * tn * tf * osz        # output tiles (double-buffered)
                  + tn * tf * 4              # f32 accumulator scratch
                  + 2 * tf * 4)              # bias
    resident = (tf == f_out_pad) and (2 * support_bytes + base_bytes <= 20 * _MIB)

    if resident:
        kernel = functools.partial(_gcn_kernel_resident, tk=tk)
        support_spec = pl.BlockSpec((n_pad, f_out_pad), lambda i, j, k: (0, 0))
        vmem_need = 2 * support_bytes + base_bytes
    else:
        kernel = _gcn_kernel_streamed
        support_spec = pl.BlockSpec((tk, tf), lambda i, j, k: (k, j))
        vmem_need = 2 * tk * tf * isz + base_bytes

    vmem_limit = int(min(max(vmem_need + 8 * _MIB, 24 * _MIB), 100 * _MIB))

    out_p = pl.pallas_call(
        kernel,
        out_shape=jax.ShapeDtypeStruct((n_pad, f_out_pad), out_dtype),
        grid_spec=pltpu.PrefetchScalarGridSpec(
            num_scalar_prefetch=0,
            grid=grid,
            in_specs=[
                # adj: (tn, tk) tiles over rows i and reduction k
                pl.BlockSpec((tn, tk), lambda i, j, k: (i, k)),
                support_spec,
                # bias: f32, one row per F_out tile
                pl.BlockSpec((1, tf), lambda i, j, k: (0, j)),
            ],
            # same output block across k -> accumulator target (reduction last)
            out_specs=pl.BlockSpec((tn, tf), lambda i, j, k: (i, j)),
            scratch_shapes=[pltpu.VMEM((tn, tf), jnp.float32)],
        ),
        compiler_params=pltpu.CompilerParams(
            dimension_semantics=("parallel", "parallel", "arbitrary"),
            vmem_limit_bytes=vmem_limit,
        ),
    )(adj_p, support, b_p)

    if n_pad == N and f_out_pad == F_out:
        return out_p
    return out_p[:N, :F_out]


if __name__ == "__main__":
    # Small deterministic example consistent with the module's forward:
    #   adj: [N, N], x: [N, in_features], weight: [in_features, out_features]
    N, in_features, out_features = 128, 64, 128

    key = jax.random.PRNGKey(0)
    k_adj, k_x, k_w, k_b = jax.random.split(key, 4)

    adj_raw = jax.random.uniform(k_adj, (N, N), dtype=jnp.float32)
    adj = 0.5 * (adj_raw + adj_raw.T)

    x = jax.random.uniform(k_x, (N, in_features), dtype=jnp.float32)
    weight = jax.random.uniform(k_w, (in_features, out_features), dtype=jnp.float32)
    bias = jax.random.uniform(k_b, (out_features,), dtype=jnp.float32)

    # Default (bf16 MXU operands, f32 accumulate / bias add) path.
    out_bf16 = graph_convolution(adj, x, weight, bias)  # use_bf16=True default
    out_bf16 = jax.block_until_ready(out_bf16)
    assert out_bf16.shape == (N, out_features)
    assert out_bf16.dtype == x.dtype

    # bf16-emulated reference (same rounding points as the kernel).
    x_b = x.astype(jnp.bfloat16)
    w_b = weight.astype(jnp.bfloat16)
    support_ref = jnp.dot(x_b, w_b, preferred_element_type=jnp.float32).astype(jnp.bfloat16)
    ref_bf16 = jnp.dot(adj.astype(jnp.bfloat16), support_ref,
                       preferred_element_type=jnp.float32) + bias
    assert jnp.allclose(out_bf16, ref_bf16, atol=1e-2, rtol=1e-2), "bf16 path mismatch"

    # Exact-f32 path vs the plain-JAX reference (same semantics as PyTorch forward).
    out_f32 = graph_convolution(adj, x, weight, bias, use_bf16=False)
    out_f32 = jax.block_until_ready(out_f32)
    ref_f32 = adj @ (x @ weight) + bias
    assert jnp.allclose(out_f32, ref_f32, atol=1e-3, rtol=1e-3), "f32 path mismatch"

    print("KERNEL_OK")
</pallas_src>

<mosaic_0001>
module attributes {stable_mosaic.version = 11 : i64} {
  func.func @_support_kernel(%arg0: i32, %arg1: memref<128x64xbf16, #tpu.memory_space<vmem>>, %arg2: memref<64x128xbf16, #tpu.memory_space<vmem>>, %arg3: memref<128x128xbf16, #tpu.memory_space<vmem>>) attributes {dimension_semantics = [#tpu.dimension_semantics<parallel>], iteration_bounds = array<i64: 1>, scalar_prefetch = 0 : i64, scratch_operands = 0 : i64, tpu.core_type = #tpu.core_type<tc>, window_params = [{transform_indices = @transform_0, window_bounds = array<i64: 128, 64>}, {pipeline_mode = #tpu.pipeline_mode<synchronous>, transform_indices = @transform_1, window_bounds = array<i64: 64, 128>}, {transform_indices = @transform_2, window_bounds = array<i64: 128, 128>}]} {
    %c0 = arith.constant 0 : index
    %c0_0 = arith.constant 0 : index
    %0 = vector.load %arg1[%c0, %c0_0] : memref<128x64xbf16, #tpu.memory_space<vmem>>, vector<128x64xbf16>
    %c0_1 = arith.constant 0 : index
    %c0_2 = arith.constant 0 : index
    %1 = vector.load %arg2[%c0_1, %c0_2] : memref<64x128xbf16, #tpu.memory_space<vmem>>, vector<64x128xbf16>
    %cst = arith.constant dense<0.000000e+00> : vector<128x128xf32>
    %2 = tpu.matmul %0, %1, %cst {dimension_numbers = #tpu.dot_dimension_numbers<[1], [0], [0], [1], [0, 0, 1, 1], [], []>} : vector<128x64xbf16>, vector<64x128xbf16>, vector<128x128xf32> -> vector<128x128xf32>
    %3 = arith.truncf %2 : vector<128x128xf32> to vector<128x128xbf16>
    %c0_3 = arith.constant 0 : index
    %c0_4 = arith.constant 0 : index
    %4 = vector.load %arg3[%c0_3, %c0_4] : memref<128x128xbf16, #tpu.memory_space<vmem>>, vector<128x128xbf16>
    tpu.vector_store %arg3[%c0_3, %c0_4], %3 {strides = array<i32>} : memref<128x128xbf16, #tpu.memory_space<vmem>>, vector<128x128xbf16>,
    return
  }
  func.func @transform_0(%arg0: i32) -> (i32, i32) {
    %c0_i32 = arith.constant 0 : i32
    %c0_i32_0 = arith.constant 0 : i32
    return %arg0, %c0_i32 : i32, i32
  }
  func.func @transform_1(%arg0: i32) -> (i32, i32) {
    %c0_i32 = arith.constant 0 : i32
    %c0_i32_0 = arith.constant 0 : i32
    %c0_i32_1 = arith.constant 0 : i32
    return %c0_i32, %c0_i32_0 : i32, i32
  }
  func.func @transform_2(%arg0: i32) -> (i32, i32) {
    %c0_i32 = arith.constant 0 : i32
    %c0_i32_0 = arith.constant 0 : i32
    return %arg0, %c0_i32 : i32, i32
  }
}

</mosaic_0001>

<llo_original>
// kernel: tpu_custom_call.1
$region0: #{tpu_custom_call.1}
  #allocation0 [shape = 'u32[]', space=smem, size = 0x4, offset = 0x4, fixed_abs, tag = 'smem constant byte address 0x4 - core index']
  #allocation1 [shape = 'u32[144,128]{1,0:T(1,128)}', space=vmem, size = 0x12000, scoped, tag = 'internal scratch']
  %s0 = inlined_call_operand.vmem [shape: bf16[128,64], index: 0, kind: input, shape index: {}]
  %s1 = inlined_call_operand.vmem [shape: bf16[64,128], index: 1, kind: input, shape index: {}]
  %s2 = inlined_call_operand.hbm [shape: bf16[128,128], index: 2, kind: output, shape index: {}]
  %s3 = sld [smem:[#allocation0]]
  $region18: #{tpu_custom_call.1} parent=0
    _
  %s5 = ssub.s32 1, %s3
  %s6 = scalar_select 0, %s5, %s3
  $region1: #{tpu_custom_call.1} parent=0
    #allocation2 [shape = 'u8[32768]{0}', space=vmem, size = 0x8000, scoped, tag = 'output window, operand 0, single buffered']
    #allocation3 [shape = 's32[1]{0}', space=sflag, size = 0x4, scoped, tag = 'scoped memory for tpu_custom_call.1']
    %7 = vsyncpa [#allocation3], 0
    // Predicated region
    $region2: #{tpu_custom_call.1} parent=1 // pred_check
      _
    $region3: #{tpu_custom_call.1} parent=1 // pred_check_branch
      %9 = sbr.rel (0) target = $region5
    $region4: #{tpu_custom_call.1} parent=1 // pred_region
      _
    $region5: #{tpu_custom_call.1} parent=1 // pred_fallthru
      _
    // Predicated region
    $region6: #{tpu_custom_call.1} parent=1 // pred_check
      _
    $region7: #{tpu_custom_call.1} parent=1 // pred_check_branch
      %11 = sbr.rel (0) target = $region9
    $region8: #{tpu_custom_call.1} parent=1 // pred_region
      _
    $region9: #{tpu_custom_call.1} parent=1 // pred_fallthru
      _
    %v13 = vld [vmem:[%s0] sm:$0xf]
    %v14 = vld [vmem:[%s0 + $0x4] sm:$0xf]
    %v15 = vld [vmem:[%s0 + $0x8] sm:$0xf]
    %v16 = vld [vmem:[%s0 + $0xc] sm:$0xf]
    %v17 = vld [vmem:[%s0 + $0x10] sm:$0xf]
    %v18 = vld [vmem:[%s0 + $0x14] sm:$0xf]
    %v19 = vld [vmem:[%s0 + $0x18] sm:$0xf]
    %v20 = vld [vmem:[%s0 + $0x1c] sm:$0xf]
    %v21 = vld [vmem:[%s0 + $0x20] sm:$0xf]
    %v22 = vld [vmem:[%s0 + $0x24] sm:$0xf]
    %v23 = vld [vmem:[%s0 + $0x28] sm:$0xf]
    %v24 = vld [vmem:[%s0 + $0x2c] sm:$0xf]
    %v25 = vld [vmem:[%s0 + $0x30] sm:$0xf]
    %v26 = vld [vmem:[%s0 + $0x34] sm:$0xf]
    %v27 = vld [vmem:[%s0 + $0x38] sm:$0xf]
    %v28 = vld [vmem:[%s0 + $0x3c] sm:$0xf]
    %v29 = vld [vmem:[%s1] sm:$0xf]
    %v30 = vld [vmem:[%s1 + $0x4] sm:$0xf]
    %v31 = vld [vmem:[%s1 + $0x8] sm:$0xf]
    %v32 = vld [vmem:[%s1 + $0xc] sm:$0xf]
    %v33 = vld [vmem:[%s1 + $0x10] sm:$0xf]
    %v34 = vld [vmem:[%s1 + $0x14] sm:$0xf]
    %v35 = vld [vmem:[%s1 + $0x18] sm:$0xf]
    %v36 = vld [vmem:[%s1 + $0x1c] sm:$0xf]
    %v53 = vunpack.c.l.b16 %v13
    %v54 = vunpack.c.l.b16 %v14
    %v55 = vunpack.c.l.b16 %v15
    %v56 = vunpack.c.l.b16 %v16
    %v57 = vunpack.c.l.b16 %v17
    %v58 = vunpack.c.l.b16 %v18
    %v59 = vunpack.c.l.b16 %v19
    %v60 = vunpack.c.l.b16 %v20
    %v61 = vunpack.c.l.b16 %v21
    %v62 = vunpack.c.l.b16 %v22
    %v63 = vunpack.c.l.b16 %v23
    %v64 = vunpack.c.l.b16 %v24
    %v65 = vunpack.c.l.b16 %v25
    %v66 = vunpack.c.l.b16 %v26
    %v67 = vunpack.c.l.b16 %v27
    %v68 = vunpack.c.l.b16 %v28
    %v69 = vpack.c.b16 %v54, %v53
    %v70 = vpack.c.b16 %v56, %v55
    %v71 = vpack.c.b16 %v58, %v57
    %v72 = vpack.c.b16 %v60, %v59
    %v73 = vpack.c.b16 %v62, %v61
    %v74 = vpack.c.b16 %v64, %v63
    %v75 = vpack.c.b16 %v66, %v65
    %v76 = vpack.c.b16 %v68, %v67
    %v85 = vunpack.c.l.b16 %v29
    %v86 = vunpack.c.l.b16 %v30
    %v87 = vunpack.c.l.b16 %v31
    %v88 = vunpack.c.l.b16 %v32
    %v89 = vunpack.c.l.b16 %v33
    %v90 = vunpack.c.l.b16 %v34
    %v91 = vunpack.c.l.b16 %v35
    %v92 = vunpack.c.l.b16 %v36
    %v93 = vpack.c.b16 %v86, %v85
    %v94 = vpack.c.b16 %v88, %v87
    %v95 = vpack.c.b16 %v90, %v89
    %v96 = vpack.c.b16 %v92, %v91
    %vm101 = vcmask 523264
    %v103 = vsel %vm101, %v69, 0
    %v106 = vsel %vm101, %v70, 0
    %v109 = vsel %vm101, %v71, 0
    %v112 = vsel %vm101, %v72, 0
    %v115 = vsel %vm101, %v73, 0
    %v118 = vsel %vm101, %v74, 0
    %v121 = vsel %vm101, %v75, 0
    %v124 = vsel %vm101, %v76, 0
    %126 = vmatprep.subr.bf16.mxu0 0
    %127 = vmatpush1.bf16.msra.mxu0 %v93
    %128 = vmatprep.subr.bf16.mxu0 0
    %129 = vmatpush1.bf16.msra.mxu0 %v94
    %130 = vmatprep.subr.bf16.mxu0 0
    %131 = vmatpush1.bf16.msra.mxu0 %v95
    %132 = vmatprep.subr.bf16.mxu0 0
    %133 = vmatpush1.bf16.msra.mxu0 %v96
    %134 = vmatprep.subr.bf16.mxu0 0
    %135 = vmatpush1.bf16.msra.mxu0 0
    %136 = vmatprep.subr.bf16.mxu0 0
    %137 = vmatpush1.bf16.msra.mxu0 0
    %138 = vmatprep.subr.bf16.mxu0 0
    %139 = vmatpush1.bf16.msra.mxu0 0
    %140 = vmatprep.subr.bf16.mxu0 0
    %141 = vmatpush1.bf16.msra.mxu0 0
    %142 = vmatprep.subr.bf16.mxu0 0
    %143 = vmatpush1.bf16.msra.mxu0 0
    %144 = vmatprep.subr.bf16.mxu0 0
    %145 = vmatpush1.bf16.msra.mxu0 0
    %146 = vmatprep.subr.bf16.mxu0 0
    %147 = vmatpush1.bf16.msra.mxu0 0
    %148 = vmatprep.subr.bf16.mxu0 0
    %149 = vmatpush1.bf16.msra.mxu0 0
    %150 = vmatprep.subr.bf16.mxu0 0
    %151 = vmatpush1.bf16.msra.mxu0 0
    %152 = vmatprep.subr.bf16.mxu0 0
    %153 = vmatpush1.bf16.msra.mxu0 0
    %154 = vmatprep.subr.bf16.mxu0 0
    %155 = vmatpush1.bf16.msra.mxu0 0
    %156 = vmatprep.subr.bf16.mxu0 0
    %157 = vmatpush1.bf16.msra.mxu0 0
    %158 = vmatprep.mubr.bf16.mxu0 0
    %159 = vmatmul.mubr.bf16.gmra.mrb[0].mxu0 %v103
    %v160 = vpop.f32.mrb[0].mxu0
    %v161 = vadd.f32 0.0, %v160
    %v162 = vpop.f32.mrb[0].mxu0
    %v163 = vpop.f32.mrb[0].mxu0
    %v164 = vadd.f32 0.0, %v163
    %v165 = vpop.f32.mrb[0].mxu0
    %166 = vmatprep.mubr.bf16.mxu0 0
    %167 = vmatmul.mubr.bf16.gmra.mrb[0].mxu0 %v106
    %v168 = vpop.f32.mrb[0].mxu0
    %v169 = vadd.f32 0.0, %v168
    %v170 = vpop.f32.mrb[0].mxu0
    %v171 = vpop.f32.mrb[0].mxu0
    %v172 = vadd.f32 0.0, %v171
    %v173 = vpop.f32.mrb[0].mxu0
    %174 = vmatprep.mubr.bf16.mxu0 0
    %175 = vmatmul.mubr.bf16.gmra.mrb[0].mxu0 %v109
    %v176 = vpop.f32.mrb[0].mxu0
    %v177 = vadd.f32 0.0, %v176
    %v178 = vpop.f32.mrb[0].mxu0
    %v179 = vpop.f32.mrb[0].mxu0
    %v180 = vadd.f32 0.0, %v179
    %v181 = vpop.f32.mrb[0].mxu0
    %182 = vmatprep.mubr.bf16.mxu0 0
    %183 = vmatmul.mubr.bf16.gmra.mrb[0].mxu0 %v112
    %v184 = vpop.f32.mrb[0].mxu0
    %v185 = vadd.f32 0.0, %v184
    %v186 = vpop.f32.mrb[0].mxu0
    %v187 = vpop.f32.mrb[0].mxu0
    %v188 = vadd.f32 0.0, %v187
    %v189 = vpop.f32.mrb[0].mxu0
    %190 = vmatprep.mubr.bf16.mxu0 0
    %191 = vmatmul.mubr.bf16.gmra.mrb[0].mxu0 %v115
    %v192 = vpop.f32.mrb[0].mxu0
    %v193 = vadd.f32 0.0, %v192
    %v194 = vpop.f32.mrb[0].mxu0
    %v195 = vpop.f32.mrb[0].mxu0
    %v196 = vadd.f32 0.0, %v195
    %v197 = vpop.f32.mrb[0].mxu0
    %198 = vmatprep.mubr.bf16.mxu0 0
    %199 = vmatmul.mubr.bf16.gmra.mrb[0].mxu0 %v118
    %v200 = vpop.f32.mrb[0].mxu0
    %v201 = vadd.f32 0.0, %v200
    %v202 = vpop.f32.mrb[0].mxu0
    %v203 = vpop.f32.mrb[0].mxu0
    %v204 = vadd.f32 0.0, %v203
    %v205 = vpop.f32.mrb[0].mxu0
    %206 = vmatprep.mubr.bf16.mxu0 0
    %207 = vmatmul.mubr.bf16.gmra.mrb[0].mxu0 %v121
    %v208 = vpop.f32.mrb[0].mxu0
    %v209 = vadd.f32 0.0, %v208
    %v210 = vpop.f32.mrb[0].mxu0
    %v211 = vpop.f32.mrb[0].mxu0
    %v212 = vadd.f32 0.0, %v211
    %v213 = vpop.f32.mrb[0].mxu0
    %214 = vmatprep.mubr.bf16.mxu0 0
    %215 = vmatmul.mubr.bf16.gmra.mrb[0].mxu0 %v124
    %v216 = vpop.f32.mrb[0].mxu0
    %v217 = vadd.f32 0.0, %v216
    %v218 = vpop.f32.mrb[0].mxu0
    %v219 = vpop.f32.mrb[0].mxu0
    %v220 = vadd.f32 0.0, %v219
    %v221 = vpop.f32.mrb[0].mxu0
    %222 = vdwg.mxu0
    %v223 = vpack.c.bf16 %v164, %v161
    %v224 = vpack.c.bf16 %v172, %v169
    %v225 = vpack.c.bf16 %v180, %v177
    %v226 = vpack.c.bf16 %v188, %v185
    %v227 = vpack.c.bf16 %v196, %v193
    %v228 = vpack.c.bf16 %v204, %v201
    %v229 = vpack.c.bf16 %v212, %v209
    %v230 = vpack.c.bf16 %v220, %v217
    %v239 = vunpack.c.l.b16 %v223
    %v240 = vunpack.c.h.b16 %v223
    %v241 = vunpack.c.l.b16 %v224
    %v242 = vunpack.c.h.b16 %v224
    %v243 = vunpack.c.l.b16 %v225
    %v244 = vunpack.c.h.b16 %v225
    %v245 = vunpack.c.l.b16 %v226
    %v246 = vunpack.c.h.b16 %v226
    %v247 = vunpack.c.l.b16 %v227
    %v248 = vunpack.c.h.b16 %v227
    %v249 = vunpack.c.l.b16 %v228
    %v250 = vunpack.c.h.b16 %v228
    %v251 = vunpack.c.l.b16 %v229
    %v252 = vunpack.c.h.b16 %v229
    %v253 = vunpack.c.l.b16 %v230
    %v254 = vunpack.c.h.b16 %v230
    %v255 = vpack.c.b16 %v239, %v239
    %v256 = vpack.c.b16 %v240, %v240
    %v257 = vpack.c.b16 %v241, %v241
    %v258 = vpack.c.b16 %v242, %v242
    %v259 = vpack.c.b16 %v243, %v243
    %v260 = vpack.c.b16 %v244, %v244
    %v261 = vpack.c.b16 %v245, %v245
    %v262 = vpack.c.b16 %v246, %v246
    %v263 = vpack.c.b16 %v247, %v247
    %v264 = vpack.c.b16 %v248, %v248
    %v265 = vpack.c.b16 %v249, %v249
    %v266 = vpack.c.b16 %v250, %v250
    %v267 = vpack.c.b16 %v251, %v251
    %v268 = vpack.c.b16 %v252, %v252
    %v269 = vpack.c.b16 %v253, %v253
    %v270 = vpack.c.b16 %v254, %v254
    %287 = vst [vmem:[#allocation2] sm:$0xf] %v255
    %288 = vst [vmem:[#allocation2 + $0x4] sm:$0xf] %v256
    %289 = vst [vmem:[#allocation2 + $0x8] sm:$0xf] %v257
    %290 = vst [vmem:[#allocation2 + $0xc] sm:$0xf] %v258
    %291 = vst [vmem:[#allocation2 + $0x10] sm:$0xf] %v259
    %292 = vst [vmem:[#allocation2 + $0x14] sm:$0xf] %v260
    %293 = vst [vmem:[#allocation2 + $0x18] sm:$0xf] %v261
    %294 = vst [vmem:[#allocation2 + $0x1c] sm:$0xf] %v262
    %295 = vst [vmem:[#allocation2 + $0x20] sm:$0xf] %v263
    %296 = vst [vmem:[#allocation2 + $0x24] sm:$0xf] %v264
    %297 = vst [vmem:[#allocation2 + $0x28] sm:$0xf] %v265
    %298 = vst [vmem:[#allocation2 + $0x2c] sm:$0xf] %v266
    %299 = vst [vmem:[#allocation2 + $0x30] sm:$0xf] %v267
    %300 = vst [vmem:[#allocation2 + $0x34] sm:$0xf] %v268
    %301 = vst [vmem:[#allocation2 + $0x38] sm:$0xf] %v269
    %302 = vst [vmem:[#allocation2 + $0x3c] sm:$0xf] %v270
    // Predicated region
    $region10: #{tpu_custom_call.1} parent=1 // pred_check
      _
    $region11: #{tpu_custom_call.1} parent=1 // pred_check_branch
      %304 = sbr.rel (0) target = $region13
    $region12: #{tpu_custom_call.1} parent=1 // pred_region
      %s306 = ssub.s32 1024, 1024
      %307 = vsyncadd [#allocation3], %s306
      %s308 = sshll.u32 [#allocation2], 4
      %s309 = int_to_ptr.vmem [resolvable:$true] %s308
      %314 = dma.vmem_to_hbm [thread:$0]  %s309, 1024, %s2, [#allocation3], 64, 64, 4
    $region13: #{tpu_custom_call.1} parent=1 // pred_fallthru
      _
    // Predicated region
    $region14: #{tpu_custom_call.1} parent=1 // pred_check
      _
    $region15: #{tpu_custom_call.1} parent=1 // pred_check_branch
      %316 = sbr.rel (0) target = $region17
    $region16: #{tpu_custom_call.1} parent=1 // pred_region
      %317 = dma.done [#allocation3], 1024
    $region17: #{tpu_custom_call.1} parent=1 // pred_fallthru
      _
    %318 = vsyncpa [#allocation3], 1

</llo_original>
